<compile_context>
chip_gen: v6e
topology: v6e:2x2x1
jax: 0.10.0
libtpu: 0.0.40
codegen_flags: <defaults>
</compile_context>

<pallas_src>
import functools
import math

import jax
import jax.numpy as jnp
from jax.experimental import pallas as pl
from jax.experimental.pallas import tpu as pltpu


def _network_kernel(x_ref, p_ref, out_ref):
    """x_ref: (4, TB) feature-major states (VMEM).
    p_ref:  (10,) SMEM scalars = [w00..w03, w10..w13, b0, b1].
    out_ref: (4, TB) slab, rows = [logit0, logit1, prob0, prob1]."""
    x = x_ref[...]                       # (4, TB) f32
    x0 = x[0:1, :]                       # (1, TB) feature rows
    x1 = x[1:2, :]
    x2 = x[2:3, :]
    x3 = x[3:4, :]

    # Linear(4, 2): scalar-splat multiply-adds across feature rows -> pure VALU,
    # no MXU, no cross-lane reduce.
    l0 = p_ref[0] * x0 + p_ref[1] * x1 + p_ref[2] * x2 + p_ref[3] * x3 + p_ref[8]
    l1 = p_ref[4] * x0 + p_ref[5] * x1 + p_ref[6] * x2 + p_ref[7] * x3 + p_ref[9]

    # 2-class softmax == sigmoid(logit difference): one exp (EUP slot) + one exact
    # reciprocal; p1 = 1 - p0 so the row-sum invariant is exact.
    d = l1 - l0
    pr0 = pl.reciprocal(1.0 + jnp.exp(d))
    pr1 = 1.0 - pr0

    # Single lane-dense store: sublane rows 0..3 = [l0, l1, p0, p1].
    out_ref[...] = jnp.concatenate([l0, l1, pr0, pr1], axis=0)   # (4, TB)


def _round_up(n, m):
    return ((n + m - 1) // m) * m


@functools.partial(jax.jit, static_argnames=("block_cols",))
def network_forward_batch(states, params, block_cols=8192):
    """states: (B, 4) f32; params: (10,) f32 = [W.flatten(), b].
    Returns (real (B, 2), output1 (B, 2))."""
    assert block_cols % 128 == 0
    B = states.shape[0]

    # Batch tile along the lane axis: at least 128 lanes, capped at block_cols.
    tb = min(_round_up(max(B, 128), 128), block_cols)
    bp = _round_up(B, tb)

    x = states.astype(jnp.float32).T                 # (4, B) feature-major
    if bp != B:
        x = jnp.pad(x, ((0, 0), (0, bp - B)))        # (4, bp)

    out = pl.pallas_call(
        _network_kernel,
        out_shape=jax.ShapeDtypeStruct((4, bp), jnp.float32),
        grid_spec=pltpu.PrefetchScalarGridSpec(
            num_scalar_prefetch=0,
            grid=(bp // tb,),
            in_specs=[
                pl.BlockSpec((4, tb), lambda i: (0, i)),            # states tile (VMEM)
                pl.BlockSpec(memory_space=pltpu.MemorySpace.SMEM),  # packed params (scalars)
            ],
            out_specs=pl.BlockSpec((4, tb), lambda i: (0, i)),      # [l0;l1;p0;p1] slab
        ),
        compiler_params=pltpu.CompilerParams(
            dimension_semantics=("parallel",)),       # v7x: shard batch tiles across TCs
    )(x, params)

    output1 = out[0:2, :B].T                          # (B, 2) logits
    real = out[2:4, :B].T                             # (B, 2) softmax
    return real, output1


class Network:
    """JAX/Pallas port of the PyTorch `Network` module (forward pass only)."""

    def __init__(self, key=jax.random.PRNGKey(0)):
        self.num_inputs = 4
        self.num_outputs = 2
        # nn.Linear default init: U(-1/sqrt(in), 1/sqrt(in)); bias forced to zeros per spec.
        bound = 1.0 / math.sqrt(self.num_inputs)
        self.weight = jax.random.uniform(
            key, (self.num_outputs, self.num_inputs),
            minval=-bound, maxval=bound, dtype=jnp.float32)
        self.bias = jnp.zeros((self.num_outputs,), dtype=jnp.float32)
        self.alpha = 0.5
        self._params_key = None
        self._params = None

    # TODO(synk): REINFORCE helpers (log_gradients / changeParameters) need autograd
    # plumbing outside the forward pass and are not translated here.

    def _packed_params(self):
        """Flat (10,) f32 = [w00..w03, w10..w13, b0, b1]; cached until weights change."""
        key = (id(self.weight), id(self.bias))
        if self._params_key != key:
            self._params = jnp.concatenate(
                [self.weight.astype(jnp.float32).reshape(-1),
                 self.bias.astype(jnp.float32).reshape(-1)])
            self._params_key = key
        return self._params

    def forward_batch(self, states, block_cols=8192):
        """states: (B, 4) -> (real (B, 2), output1 (B, 2)). Preferred entry point."""
        return network_forward_batch(jnp.asarray(states, dtype=jnp.float32),
                                     self._packed_params(), block_cols=block_cols)

    def forward(self, pos, vel, angle, tip_vel):
        pairs = jnp.asarray([pos, vel, angle, tip_vel], dtype=jnp.float32).reshape(1, 4)
        real, out1 = network_forward_batch(pairs, self._packed_params())
        return real[0], out1[0]                        # (2,), (2,)

    __call__ = forward

    def getParameters(self):
        return self.weight

    def updateLearningParameter(self, num_episodes, avg):
        self.alpha = max(0.5 * pow(0.5, int(num_episodes / avg)), 0.005)

    def getLearningParameter(self):
        return self.alpha


if __name__ == "__main__":
    net = Network(key=jax.random.PRNGKey(0))

    # --- Batched forward: 8 CartPole states (pos, vel, angle, tip_vel) ---
    states = jax.random.normal(jax.random.PRNGKey(0), (8, 4), dtype=jnp.float32)
    real_b, out1_b = net.forward_batch(states)
    jax.block_until_ready((real_b, out1_b))

    ref_logits = states @ net.weight.T + net.bias
    ref_softmax = jax.nn.softmax(ref_logits, axis=-1)
    assert out1_b.shape == (8, 2) and real_b.shape == (8, 2)
    assert jnp.allclose(out1_b, ref_logits, atol=1e-5), (out1_b, ref_logits)
    assert jnp.allclose(real_b, ref_softmax, atol=1e-5), (real_b, ref_softmax)
    assert jnp.allclose(jnp.sum(real_b, axis=-1), 1.0, atol=1e-5)

    # --- Single-state forward (PyTorch-style API); exercises the lane-padded path ---
    pos, vel, angle, tip_vel = [float(v) for v in states[0]]
    real_1, out1_1 = net(pos, vel, angle, tip_vel)
    jax.block_until_ready((real_1, out1_1))
    assert jnp.allclose(out1_1, ref_logits[0], atol=1e-5)
    assert jnp.allclose(real_1, ref_softmax[0], atol=1e-5)

    # --- Odd batch size (padding to 128 lanes) ---
    states3 = jax.random.normal(jax.random.PRNGKey(1), (3, 4), dtype=jnp.float32)
    real_3, out1_3 = net.forward_batch(states3)
    jax.block_until_ready((real_3, out1_3))
    ref3 = states3 @ net.weight.T + net.bias
    assert jnp.allclose(out1_3, ref3, atol=1e-5)
    assert jnp.allclose(real_3, jax.nn.softmax(ref3, -1), atol=1e-5)

    # --- Multi-tile grid (small block_cols forces 3 grid steps + tail padding) ---
    states_m = jax.random.normal(jax.random.PRNGKey(2), (300, 4), dtype=jnp.float32)
    real_m, out1_m = net.forward_batch(states_m, block_cols=128)
    jax.block_until_ready((real_m, out1_m))
    ref_m = states_m @ net.weight.T + net.bias
    assert out1_m.shape == (300, 2) and real_m.shape == (300, 2)
    assert jnp.allclose(out1_m, ref_m, atol=1e-5)
    assert jnp.allclose(real_m, jax.nn.softmax(ref_m, -1), atol=1e-5)

    print("KERNEL_OK")
</pallas_src>

<mosaic_0001>
module attributes {stable_mosaic.version = 11 : i64} {
  func.func @_network_kernel(%arg0: i32, %arg1: memref<4x128xf32, #tpu.memory_space<vmem>>, %arg2: memref<10xf32, #tpu.memory_space<smem>>, %arg3: memref<4x128xf32, #tpu.memory_space<vmem>>) attributes {dimension_semantics = [#tpu.dimension_semantics<parallel>], iteration_bounds = array<i64: 1>, scalar_prefetch = 0 : i64, scratch_operands = 0 : i64, tpu.core_type = #tpu.core_type<tc>, window_params = [{transform_indices = @transform_0, window_bounds = array<i64: 4, 128>}, {transform_indices = @transform_1, window_bounds = array<i64: 10>}, {transform_indices = @transform_2, window_bounds = array<i64: 4, 128>}]} {
    %c0 = arith.constant 0 : index
    %c0_0 = arith.constant 0 : index
    %0 = vector.load %arg1[%c0, %c0_0] : memref<4x128xf32, #tpu.memory_space<vmem>>, vector<4x128xf32>
    %1 = vector.extract_strided_slice %0 {offsets = [0, 0], sizes = [1, 128], strides = [1, 1]} : vector<4x128xf32> to vector<1x128xf32>
    %2 = vector.extract_strided_slice %0 {offsets = [1, 0], sizes = [1, 128], strides = [1, 1]} : vector<4x128xf32> to vector<1x128xf32>
    %3 = vector.extract_strided_slice %0 {offsets = [2, 0], sizes = [1, 128], strides = [1, 1]} : vector<4x128xf32> to vector<1x128xf32>
    %4 = vector.extract_strided_slice %0 {offsets = [3, 0], sizes = [1, 128], strides = [1, 1]} : vector<4x128xf32> to vector<1x128xf32>
    %c0_1 = arith.constant 0 : index
    %5 = memref.load %arg2[%c0_1] : memref<10xf32, #tpu.memory_space<smem>>
    %6 = vector.broadcast %5 : f32 to vector<1x128xf32>
    %7 = arith.mulf %6, %1 : vector<1x128xf32>
    %c1 = arith.constant 1 : index
    %8 = memref.load %arg2[%c1] : memref<10xf32, #tpu.memory_space<smem>>
    %9 = vector.broadcast %8 : f32 to vector<1x128xf32>
    %10 = arith.mulf %9, %2 : vector<1x128xf32>
    %11 = arith.addf %7, %10 : vector<1x128xf32>
    %c2 = arith.constant 2 : index
    %12 = memref.load %arg2[%c2] : memref<10xf32, #tpu.memory_space<smem>>
    %13 = vector.broadcast %12 : f32 to vector<1x128xf32>
    %14 = arith.mulf %13, %3 : vector<1x128xf32>
    %15 = arith.addf %11, %14 : vector<1x128xf32>
    %c3 = arith.constant 3 : index
    %16 = memref.load %arg2[%c3] : memref<10xf32, #tpu.memory_space<smem>>
    %17 = vector.broadcast %16 : f32 to vector<1x128xf32>
    %18 = arith.mulf %17, %4 : vector<1x128xf32>
    %19 = arith.addf %15, %18 : vector<1x128xf32>
    %c8 = arith.constant 8 : index
    %20 = memref.load %arg2[%c8] : memref<10xf32, #tpu.memory_space<smem>>
    %21 = vector.broadcast %20 : f32 to vector<1x128xf32>
    %22 = arith.addf %19, %21 : vector<1x128xf32>
    %c4 = arith.constant 4 : index
    %23 = memref.load %arg2[%c4] : memref<10xf32, #tpu.memory_space<smem>>
    %24 = vector.broadcast %23 : f32 to vector<1x128xf32>
    %25 = arith.mulf %24, %1 : vector<1x128xf32>
    %c5 = arith.constant 5 : index
    %26 = memref.load %arg2[%c5] : memref<10xf32, #tpu.memory_space<smem>>
    %27 = vector.broadcast %26 : f32 to vector<1x128xf32>
    %28 = arith.mulf %27, %2 : vector<1x128xf32>
    %29 = arith.addf %25, %28 : vector<1x128xf32>
    %c6 = arith.constant 6 : index
    %30 = memref.load %arg2[%c6] : memref<10xf32, #tpu.memory_space<smem>>
    %31 = vector.broadcast %30 : f32 to vector<1x128xf32>
    %32 = arith.mulf %31, %3 : vector<1x128xf32>
    %33 = arith.addf %29, %32 : vector<1x128xf32>
    %c7 = arith.constant 7 : index
    %34 = memref.load %arg2[%c7] : memref<10xf32, #tpu.memory_space<smem>>
    %35 = vector.broadcast %34 : f32 to vector<1x128xf32>
    %36 = arith.mulf %35, %4 : vector<1x128xf32>
    %37 = arith.addf %33, %36 : vector<1x128xf32>
    %c9 = arith.constant 9 : index
    %38 = memref.load %arg2[%c9] : memref<10xf32, #tpu.memory_space<smem>>
    %39 = vector.broadcast %38 : f32 to vector<1x128xf32>
    %40 = arith.addf %37, %39 : vector<1x128xf32>
    %41 = arith.subf %40, %22 : vector<1x128xf32>
    %42 = math.exp %41 : vector<1x128xf32>
    %cst = arith.constant 1.000000e+00 : f32
    %43 = vector.broadcast %cst : f32 to vector<1x128xf32>
    %44 = arith.addf %43, %42 : vector<1x128xf32>
    %45 = tpu.reciprocal %44 : vector<1x128xf32> -> vector<1x128xf32>
    %cst_2 = arith.constant 1.000000e+00 : f32
    %46 = vector.broadcast %cst_2 : f32 to vector<1x128xf32>
    %47 = arith.subf %46, %45 : vector<1x128xf32>
    %48 = tpu.concatenate %22, %40, %45, %47 in 0 : vector<1x128xf32>, vector<1x128xf32>, vector<1x128xf32>, vector<1x128xf32> -> vector<4x128xf32>
    %c0_3 = arith.constant 0 : index
    %c0_4 = arith.constant 0 : index
    %49 = vector.load %arg3[%c0_3, %c0_4] : memref<4x128xf32, #tpu.memory_space<vmem>>, vector<4x128xf32>
    tpu.vector_store %arg3[%c0_3, %c0_4], %48 {strides = array<i32>} : memref<4x128xf32, #tpu.memory_space<vmem>>, vector<4x128xf32>,
    return
  }
  func.func @transform_0(%arg0: i32) -> (i32, i32) {
    %c0_i32 = arith.constant 0 : i32
    %c0_i32_0 = arith.constant 0 : i32
    return %c0_i32, %arg0 : i32, i32
  }
  func.func @transform_1(%arg0: i32) -> i32 {
    %c0_i32 = arith.constant 0 : i32
    %c0_i32_0 = arith.constant 0 : i32
    return %c0_i32 : i32
  }
  func.func @transform_2(%arg0: i32) -> (i32, i32) {
    %c0_i32 = arith.constant 0 : i32
    %c0_i32_0 = arith.constant 0 : i32
    return %c0_i32, %arg0 : i32, i32
  }
}

</mosaic_0001>

<llo_original>
// kernel: network_forward_batch.1
$region0: #{network_forward_batch.1}
  #allocation0 [shape = 'u32[]', space=smem, size = 0x4, offset = 0x4, fixed_abs, tag = 'smem constant byte address 0x4 - core index']
  #allocation1 [shape = 'u32[144,128]{1,0:T(1,128)}', space=vmem, size = 0x12000, scoped, tag = 'internal scratch']
  %s0 = inlined_call_operand.vmem [shape: f32[4,128], index: 0, kind: input, shape index: {}]
  %s1 = inlined_call_operand.vmem [shape: f32[10], index: 1, kind: input, shape index: {}]
  %s2 = inlined_call_operand.vmem [shape: f32[4,128], index: 2, kind: output, shape index: {}]
  %s3 = sld [smem:[#allocation0]]
  $region22: #{network_forward_batch.1} parent=0
    _
  %s5 = ssub.s32 1, %s3
  %s6 = scalar_select 0, %s5, %s3
  $region1: #{network_forward_batch.1} parent=0
    #allocation2 [shape = 'u8[512]{0}', space=smem, size = 0x200, scoped, tag = 'input window, operand 1, single buffered']
    #allocation3 [shape = 's32[1]{0}', space=sflag, size = 0x4, scoped, tag = 'scoped memory for network_forward_batch.1']
    %7 = vsyncpa [#allocation3], 0
    // Predicated region
    $region2: #{network_forward_batch.1} parent=1 // pred_check
      _
    $region3: #{network_forward_batch.1} parent=1 // pred_check_branch
      %9 = sbr.rel (0) target = $region5
    $region4: #{network_forward_batch.1} parent=1 // pred_region
      _
    $region5: #{network_forward_batch.1} parent=1 // pred_fallthru
      _
    // Predicated region
    $region6: #{network_forward_batch.1} parent=1 // pred_check
      _
    $region7: #{network_forward_batch.1} parent=1 // pred_check_branch
      %11 = sbr.rel (0) target = $region9
    $region8: #{network_forward_batch.1} parent=1 // pred_region
      %s13 = ssub.s32 16, 16
      %14 = vsyncadd [#allocation3], %s13
      %s16 = sshll.u32 %s1, 4
      %s17 = int_to_ptr.vmem [resolvable:$true] %s16
      %19 = dma.vmem_to_smem %s17, 16, [#allocation2], [#allocation3]
    $region9: #{network_forward_batch.1} parent=1 // pred_fallthru
      _
    // Predicated region
    $region10: #{network_forward_batch.1} parent=1 // pred_check
      _
    $region11: #{network_forward_batch.1} parent=1 // pred_check_branch
      %21 = sbr.rel (0) target = $region13
    $region12: #{network_forward_batch.1} parent=1 // pred_region
      %22 = dma.done [#allocation3], 16
    $region13: #{network_forward_batch.1} parent=1 // pred_fallthru
      _
    %23 = sfence
    %v24 = vld [vmem:[%s0] sm:$0xf]
    %s25 = sld [smem:[#allocation2]]
    %v26 = vstv %s25
    %v27 = vmul.f32 %v26, %v24
    %s28 = sld [smem:[#allocation2 + $0x1]]
    %v29 = vstv %s28
    %v30 = vmul.f32 %v29, %v24
    %v32 = vrot.slane %v30, 1
    %v34 = vadd.f32 %v27, %v32
    %s35 = sld [smem:[#allocation2 + $0x2]]
    %v36 = vstv %s35
    %v37 = vmul.f32 %v36, %v24
    %v39 = vrot.slane %v37, 2
    %v41 = vadd.f32 %v34, %v39
    %s42 = sld [smem:[#allocation2 + $0x3]]
    %v43 = vstv %s42
    %v44 = vmul.f32 %v43, %v24
    %v46 = vrot.slane %v44, 3
    %v48 = vadd.f32 %v41, %v46
    %s49 = sld [smem:[#allocation2 + $0x8]]
    %v50 = vstv %s49
    %v51 = vadd.f32 %v48, %v50
    %s52 = sld [smem:[#allocation2 + $0x4]]
    %v53 = vstv %s52
    %v54 = vmul.f32 %v53, %v24
    %s55 = sld [smem:[#allocation2 + $0x5]]
    %v56 = vstv %s55
    %v57 = vmul.f32 %v56, %v24
    %v59 = vrot.slane %v57, 1
    %v61 = vadd.f32 %v54, %v59
    %s62 = sld [smem:[#allocation2 + $0x6]]
    %v63 = vstv %s62
    %v64 = vmul.f32 %v63, %v24
    %v66 = vrot.slane %v64, 2
    %v68 = vadd.f32 %v61, %v66
    %s69 = sld [smem:[#allocation2 + $0x7]]
    %v70 = vstv %s69
    %v71 = vmul.f32 %v70, %v24
    %v73 = vrot.slane %v71, 3
    %v75 = vadd.f32 %v68, %v73
    %s76 = sld [smem:[#allocation2 + $0x9]]
    %v77 = vstv %s76
    %v78 = vadd.f32 %v75, %v77
    %v79 = vsub.f32 %v78, %v51
    %v80 = vmul.f32 %v79, 1.442695
    %v81 = vpow.pop %v80
    %v82 = vadd.f32 %v81, 1.0
    %v83 = vrcp.pop %v82
    %v84 = vsub.f32 1.0, %v83
    %v86 = vrot.slane %v78, 7
    %v89 = vrot.slane %v83, 6
    %v92 = vrot.slane %v84, 5
    %vm94 = vcmask 1040384
    %v95 = vsel %vm94, %v51, %v86
    %vm96 = vcmask 1041408
    %v97 = vsel %vm96, %v95, %v89
    %vm98 = vcmask 1042432
    %v99 = vsel %vm98, %v97, %v92
    %100 = vst [vmem:[%s2] sm:$0xf] %v99
    // Predicated region
    $region14: #{network_forward_batch.1} parent=1 // pred_check
      _
    $region15: #{network_forward_batch.1} parent=1 // pred_check_branch
      %102 = sbr.rel (0) target = $region17
    $region16: #{network_forward_batch.1} parent=1 // pred_region
      _
    $region17: #{network_forward_batch.1} parent=1 // pred_fallthru
      _
    // Predicated region
    $region18: #{network_forward_batch.1} parent=1 // pred_check
      _
    $region19: #{network_forward_batch.1} parent=1 // pred_check_branch
      %104 = sbr.rel (0) target = $region21
    $region20: #{network_forward_batch.1} parent=1 // pred_region
      _
    $region21: #{network_forward_batch.1} parent=1 // pred_fallthru
      _
    %105 = vsyncpa [#allocation3], 1

</llo_original>
